<compile_context>
chip_gen: v7x
topology: tpu7x:2x2x1
jax: 0.10.0
libtpu: 0.0.40
codegen_flags: <defaults>
</compile_context>

<pallas_src>
import numpy as np

import jax
import jax.numpy as jnp
from jax.experimental import pallas as pl
from jax.experimental.pallas import tpu as pltpu


# Standard JPEG luminance quantization table (transposed, as in the original
# `y_table = nn.Parameter(torch.from_numpy(y_table))` source).
_Y_TABLE = np.array(
    [[16, 11, 10, 16, 24, 40, 51, 61],
     [12, 12, 14, 19, 26, 58, 60, 55],
     [14, 13, 16, 24, 40, 57, 69, 56],
     [14, 17, 22, 29, 51, 87, 80, 62],
     [18, 22, 37, 56, 68, 109, 103, 77],
     [24, 35, 55, 64, 81, 104, 113, 92],
     [49, 64, 78, 87, 103, 121, 120, 101],
     [72, 92, 95, 98, 112, 100, 103, 99]],
    dtype=np.float32).T

_TARGET_BLOCK_BYTES = 4 << 20      # input bytes per grid step
_VMEM_LIMIT_BYTES = 32 << 20       # safe on v5e / v6e / v7x


def _dequant_kernel(x_ref, t_ref, o_ref):
    # Pure elementwise multiply; the 1-row table block broadcasts along
    # sublanes.  Works for both the 2-D (scalar-factor) and 3-D (per-batch)
    # layouts.
    o_ref[...] = x_ref[...] * t_ref[...]


def _pick_lane_width(n):
    """Largest lane-dense width (multiple of 64 so the 8x8 table tiles cleanly)
    dividing n.  If n is an odd multiple of 64, pad to a multiple of 128 so
    stores are never masked 64-lane partials."""
    for lw in (4096, 2048, 1024, 512, 256, 128):
        if n % lw == 0:
            return lw, 0
    return 128, (-n) % 128


def _sublane_unit(dtype):
    itemsize = jnp.dtype(dtype).itemsize
    return max(8, 32 // itemsize)      # 8 (f32) / 16 (bf16) / 32 (int8 / fp8)


def _pick_rows_per_tile(rows, lw, dtype, want_split):
    itemsize = jnp.dtype(dtype).itemsize
    sub = _sublane_unit(dtype)
    target = max(sub, (_TARGET_BLOCK_BYTES // (lw * itemsize)) // sub * sub)
    tr = min(rows, target)
    if want_split and tr >= rows and rows >= 2 * sub:
        # Guarantee >= 2 grid steps along the (parallel) row axis so both
        # TensorCores of a v7x chip get work even when the batch axis is 1.
        half = -(-rows // 2)
        tr = -(-half // sub) * sub
    return tr


def _compiler_params(dim_sem):
    return pltpu.CompilerParams(
        dimension_semantics=dim_sem,
        vmem_limit_bytes=_VMEM_LIMIT_BYTES,
    )


def y_dequantize(image, factor=1):
    """Pallas implementation of YDequantize.forward.

    Args:
      image : (B, ..., 8, 8) float array of quantized DCT blocks.
      factor: python scalar, size-1 array, or per-batch array (B,) / (B,1,1,1).
    Returns:
      Array with the same shape as `image`: image * (y_table * factor).
    """
    image = jnp.asarray(image)
    orig_shape = image.shape
    if tuple(orig_shape[-2:]) != (8, 8):
        raise ValueError("YDequantize expects trailing (8, 8) DCT block dims")
    B = int(orig_shape[0])
    ncols = 1
    for d in orig_shape[1:]:
        ncols *= int(d)
    dtype = image.dtype
    table_flat = jnp.asarray(_Y_TABLE.reshape(-1), dtype=dtype)       # (64,)

    # Decide which forward branch we're reproducing.  A 0-d / size-1 traced
    # factor is mathematically a global scalar -> fast path.
    if isinstance(factor, (int, float)):
        scale_scalar = jnp.asarray(factor, dtype=dtype)
        per_batch = False
    else:
        f_arr = jnp.asarray(factor, dtype=dtype)
        if f_arr.size == 1:
            scale_scalar = f_arr.reshape(())
            per_batch = False
        else:
            scale = f_arr.reshape(B)          # mirrors factor.view(b, 1, 1, 1)
            per_batch = True

    if not per_batch:
        # ---- scalar fast path: one long lane-dense row axis over B*ncols ----
        total = B * ncols
        LW, pad = _pick_lane_width(total)
        flat = image.reshape(total)
        if pad:
            flat = jnp.pad(flat, (0, pad))
        rows = (total + pad) // LW
        x2 = flat.reshape(rows, LW)

        table_b = (jnp.tile(table_flat, LW // 64) * scale_scalar).reshape(1, LW)

        TR = _pick_rows_per_tile(rows, LW, dtype, want_split=True)
        grid = (pl.cdiv(rows, TR),)

        out = pl.pallas_call(
            _dequant_kernel,
            out_shape=jax.ShapeDtypeStruct((rows, LW), dtype),
            grid_spec=pltpu.PrefetchScalarGridSpec(
                num_scalar_prefetch=0,
                grid=grid,
                in_specs=[
                    pl.BlockSpec((TR, LW), lambda r: (r, 0)),
                    pl.BlockSpec((1, LW), lambda r: (0, 0)),
                ],
                out_specs=pl.BlockSpec((TR, LW), lambda r: (r, 0)),
            ),
            compiler_params=_compiler_params(("parallel",)),
        )(x2, table_b)

        out_flat = out.reshape(rows * LW)
        if pad:
            out_flat = out_flat[:total]
        return out_flat.reshape(orig_shape)

    # ---- per-batch factor path: (B, rows, LW) + resident (B, 1, LW) table ----
    LW, pad = _pick_lane_width(ncols)
    x2 = image.reshape(B, ncols)
    if pad:
        x2 = jnp.pad(x2, ((0, 0), (0, pad)))
    rows = (ncols + pad) // LW
    x2 = x2.reshape(B, rows, LW)

    t_row = jnp.tile(table_flat, LW // 64)                            # (LW,)
    table_b = scale[:, None, None] * t_row[None, None, :]             # (B,1,LW)

    TR = _pick_rows_per_tile(rows, LW, dtype, want_split=(B == 1))
    grid = (B, pl.cdiv(rows, TR))

    out = pl.pallas_call(
        _dequant_kernel,
        out_shape=jax.ShapeDtypeStruct((B, rows, LW), dtype),
        grid_spec=pltpu.PrefetchScalarGridSpec(
            num_scalar_prefetch=0,
            grid=grid,
            in_specs=[
                pl.BlockSpec((1, TR, LW), lambda b, r: (b, r, 0)),
                pl.BlockSpec((1, 1, LW), lambda b, r: (b, 0, 0)),
            ],
            out_specs=pl.BlockSpec((1, TR, LW), lambda b, r: (b, r, 0)),
        ),
        compiler_params=_compiler_params(("parallel", "parallel")),
    )(x2, table_b)

    out2 = out.reshape(B, rows * LW)
    if pad:
        out2 = out2[:, :ncols]
    return out2.reshape(orig_shape)


def _reference(image, factor=1):
    # Plain-JAX reference reproducing the PyTorch broadcast semantics.
    table = jnp.asarray(_Y_TABLE, dtype=image.dtype)
    if isinstance(factor, (int, float)):
        return image * (table * factor)
    f = jnp.asarray(factor, dtype=image.dtype)
    if f.size == 1:
        return image * (table * f.reshape(()))
    f = f.reshape(-1, 1, 1, 1)
    return image * (table[None, None, :, :] * f)


if __name__ == "__main__":
    key = jax.random.PRNGKey(0)
    k1, k2, k3 = jax.random.split(key, 3)

    # Small shapes: batch=2, 32 DCT blocks of 8x8 per image.
    B, N = 2, 32
    image = jax.random.normal(k1, (B, N, 8, 8), dtype=jnp.float32) * 50.0

    # 1) Scalar-factor fast path.
    out = jax.block_until_ready(y_dequantize(image, factor=2))
    ref = _reference(image, factor=2)
    assert out.shape == image.shape, out.shape
    assert jnp.allclose(out, ref, atol=1e-5, rtol=1e-5), "scalar-factor mismatch"

    # 2) Traced 0-d factor (previously bypassed the isinstance check).
    f0 = jnp.float32(1.5)
    out0 = jax.block_until_ready(y_dequantize(image, factor=f0))
    ref0 = _reference(image, factor=f0)
    assert jnp.allclose(out0, ref0, atol=1e-5, rtol=1e-5), "0-d factor mismatch"

    # 3) Per-batch tensor factor.
    factor = jax.random.uniform(k2, (B,), dtype=jnp.float32, minval=0.5, maxval=2.0)
    out2 = jax.block_until_ready(y_dequantize(image, factor=factor))
    ref2 = _reference(image, factor=factor)
    assert jnp.allclose(out2, ref2, atol=1e-5, rtol=1e-5), "tensor-factor mismatch"

    # 4) Odd 8x8-block count (exercises the lane-padding path), both branches.
    image_odd = jax.random.normal(k3, (B, 33, 8, 8), dtype=jnp.float32) * 50.0
    out3 = jax.block_until_ready(y_dequantize(image_odd, factor=2))
    ref3 = _reference(image_odd, factor=2)
    assert out3.shape == image_odd.shape
    assert jnp.allclose(out3, ref3, atol=1e-5, rtol=1e-5), "padded scalar mismatch"
    out4 = jax.block_until_ready(y_dequantize(image_odd, factor=factor))
    ref4 = _reference(image_odd, factor=factor)
    assert jnp.allclose(out4, ref4, atol=1e-5, rtol=1e-5), "padded tensor mismatch"

    print("KERNEL_OK")
</pallas_src>

<mosaic_0001>
module attributes {stable_mosaic.version = 11 : i64} {
  func.func @_dequant_kernel(%arg0: i32, %arg1: memref<1x4096xf32, #tpu.memory_space<vmem>>, %arg2: memref<1x4096xf32, #tpu.memory_space<vmem>>, %arg3: memref<1x4096xf32, #tpu.memory_space<vmem>>) attributes {dimension_semantics = [#tpu.dimension_semantics<parallel>], iteration_bounds = array<i64: 1>, scalar_prefetch = 0 : i64, scratch_operands = 0 : i64, tpu.core_type = #tpu.core_type<tc>, window_params = [{transform_indices = @transform_0, window_bounds = array<i64: 1, 4096>}, {pipeline_mode = #tpu.pipeline_mode<synchronous>, transform_indices = @transform_1, window_bounds = array<i64: 1, 4096>}, {transform_indices = @transform_2, window_bounds = array<i64: 1, 4096>}]} {
    %c0 = arith.constant 0 : index
    %c0_0 = arith.constant 0 : index
    %0 = vector.load %arg1[%c0, %c0_0] : memref<1x4096xf32, #tpu.memory_space<vmem>>, vector<1x4096xf32>
    %c0_1 = arith.constant 0 : index
    %c0_2 = arith.constant 0 : index
    %1 = vector.load %arg2[%c0_1, %c0_2] : memref<1x4096xf32, #tpu.memory_space<vmem>>, vector<1x4096xf32>
    %2 = arith.mulf %0, %1 : vector<1x4096xf32>
    %c0_3 = arith.constant 0 : index
    %c0_4 = arith.constant 0 : index
    %3 = vector.load %arg3[%c0_3, %c0_4] : memref<1x4096xf32, #tpu.memory_space<vmem>>, vector<1x4096xf32>
    tpu.vector_store %arg3[%c0_3, %c0_4], %2 {strides = array<i32>} : memref<1x4096xf32, #tpu.memory_space<vmem>>, vector<1x4096xf32>,
    return
  }
  func.func @transform_0(%arg0: i32) -> (i32, i32) {
    %c0_i32 = arith.constant 0 : i32
    %c0_i32_0 = arith.constant 0 : i32
    return %arg0, %c0_i32 : i32, i32
  }
  func.func @transform_1(%arg0: i32) -> (i32, i32) {
    %c0_i32 = arith.constant 0 : i32
    %c0_i32_0 = arith.constant 0 : i32
    %c0_i32_1 = arith.constant 0 : i32
    return %c0_i32, %c0_i32_0 : i32, i32
  }
  func.func @transform_2(%arg0: i32) -> (i32, i32) {
    %c0_i32 = arith.constant 0 : i32
    %c0_i32_0 = arith.constant 0 : i32
    return %arg0, %c0_i32 : i32, i32
  }
}

</mosaic_0001>

<llo_original>
// kernel: tpu_custom_call.1
$region0: #{tpu_custom_call.1}
  #allocation0 [shape = 'u32[]', space=smem, size = 0x4, offset = 0x4, fixed_abs, tag = 'smem constant byte address 0x4 - core index']
  #allocation1 [shape = 'u32[144,128]{1,0:T(1,128)}', space=vmem, size = 0x12000, scoped, tag = 'internal scratch']
  %s0 = inlined_call_operand.hbm [shape: f32[1,4096], index: 0, kind: input, shape index: {}]
  %s1 = inlined_call_operand.hbm [shape: f32[1,4096], index: 1, kind: input, shape index: {}]
  %s2 = inlined_call_operand.hbm [shape: f32[1,4096], index: 2, kind: output, shape index: {}]
  %s3 = sld [smem:[#allocation0]]
  $region26: #{tpu_custom_call.1} parent=0
    _
  %s5 = ssub.s32 1, %s3
  %s6 = scalar_select 0, %s5, %s3
  $region1: #{tpu_custom_call.1} parent=0
    #allocation2 [shape = 'u8[16384]{0}', space=vmem, size = 0x4000, scoped, tag = 'input window, operand 0, single buffered']
    #allocation3 [shape = 's32[1]{0}', space=sflag, size = 0x4, scoped, tag = 'scoped memory for tpu_custom_call.1']
    #allocation4 [shape = 's32[1]{0}', space=sflag, size = 0x4, scoped, tag = 'scoped memory for tpu_custom_call.1']
    #allocation5 [shape = 'u8[16384]{0}', space=vmem, size = 0x4000, scoped, tag = 'input window, operand 1, single buffered']
    #allocation6 [shape = 's32[1]{0}', space=sflag, size = 0x4, scoped, tag = 'scoped memory for tpu_custom_call.1']
    #allocation7 [shape = 'u8[16384]{0}', space=vmem, size = 0x4000, scoped, tag = 'output window, operand 0, single buffered']
    %7 = vsyncpa [#allocation3], 0
    %8 = vsyncpa [#allocation6], 0
    %9 = vsyncpa [#allocation4], 0
    // Predicated region
    $region2: #{tpu_custom_call.1} parent=1 // pred_check
      _
    $region3: #{tpu_custom_call.1} parent=1 // pred_check_branch
      %11 = sbr.rel (0) target = $region5
    $region4: #{tpu_custom_call.1} parent=1 // pred_region
      %s13 = ssub.s32 512, 512
      %14 = vsyncadd [#allocation3], %s13
      %s16 = sshll.u32 [#allocation2], 4
      %s17 = int_to_ptr.vmem [resolvable:$true] %s16
      %19 = dma.hbm_to_vmem [thread:$0]  %s0, 512, %s17, [#allocation3]
    $region5: #{tpu_custom_call.1} parent=1 // pred_fallthru
      _
    // Predicated region
    $region6: #{tpu_custom_call.1} parent=1 // pred_check
      _
    $region7: #{tpu_custom_call.1} parent=1 // pred_check_branch
      %21 = sbr.rel (0) target = $region9
    $region8: #{tpu_custom_call.1} parent=1 // pred_region
      %s23 = ssub.s32 512, 512
      %24 = vsyncadd [#allocation6], %s23
      %s26 = sshll.u32 [#allocation5], 4
      %s27 = int_to_ptr.vmem [resolvable:$true] %s26
      %29 = dma.hbm_to_vmem [thread:$0]  %s1, 512, %s27, [#allocation6]
    $region9: #{tpu_custom_call.1} parent=1 // pred_fallthru
      _
    // Predicated region
    $region10: #{tpu_custom_call.1} parent=1 // pred_check
      _
    $region11: #{tpu_custom_call.1} parent=1 // pred_check_branch
      %31 = sbr.rel (0) target = $region13
    $region12: #{tpu_custom_call.1} parent=1 // pred_region
      %32 = dma.done [#allocation3], 512
    $region13: #{tpu_custom_call.1} parent=1 // pred_fallthru
      _
    // Predicated region
    $region14: #{tpu_custom_call.1} parent=1 // pred_check
      _
    $region15: #{tpu_custom_call.1} parent=1 // pred_check_branch
      %34 = sbr.rel (0) target = $region17
    $region16: #{tpu_custom_call.1} parent=1 // pred_region
      %35 = dma.done [#allocation6], 512
    $region17: #{tpu_custom_call.1} parent=1 // pred_fallthru
      _
    %v36 = vld [vmem:[#allocation2] sm:$0xff]
    %v37 = vld [vmem:[#allocation2 + $0x8] sm:$0xff]
    %v38 = vld [vmem:[#allocation2 + $0x10] sm:$0xff]
    %v39 = vld [vmem:[#allocation2 + $0x18] sm:$0xff]
    %v40 = vld [vmem:[#allocation5] sm:$0xff]
    %v41 = vld [vmem:[#allocation5 + $0x8] sm:$0xff]
    %v42 = vld [vmem:[#allocation5 + $0x10] sm:$0xff]
    %v43 = vld [vmem:[#allocation5 + $0x18] sm:$0xff]
    %v44 = vmul.f32 %v36, %v40
    %v45 = vmul.f32 %v37, %v41
    %v46 = vmul.f32 %v38, %v42
    %v47 = vmul.f32 %v39, %v43
    %48 = vst [vmem:[#allocation7] sm:$0xff] %v44
    %49 = vst [vmem:[#allocation7 + $0x8] sm:$0xff] %v45
    %50 = vst [vmem:[#allocation7 + $0x10] sm:$0xff] %v46
    %51 = vst [vmem:[#allocation7 + $0x18] sm:$0xff] %v47
    // Predicated region
    $region18: #{tpu_custom_call.1} parent=1 // pred_check
      _
    $region19: #{tpu_custom_call.1} parent=1 // pred_check_branch
      %53 = sbr.rel (0) target = $region21
    $region20: #{tpu_custom_call.1} parent=1 // pred_region
      %s55 = ssub.s32 512, 512
      %56 = vsyncadd [#allocation4], %s55
      %s58 = sshll.u32 [#allocation7], 4
      %s59 = int_to_ptr.vmem [resolvable:$true] %s58
      %61 = dma.vmem_to_hbm [thread:$0]  %s59, 512, %s2, [#allocation4]
    $region21: #{tpu_custom_call.1} parent=1 // pred_fallthru
      _
    // Predicated region
    $region22: #{tpu_custom_call.1} parent=1 // pred_check
      _
    $region23: #{tpu_custom_call.1} parent=1 // pred_check_branch
      %63 = sbr.rel (0) target = $region25
    $region24: #{tpu_custom_call.1} parent=1 // pred_region
      %64 = dma.done [#allocation4], 512
    $region25: #{tpu_custom_call.1} parent=1 // pred_fallthru
      _
    %65 = vsyncpa [#allocation3], 1
    %66 = vsyncpa [#allocation6], 1
    %67 = vsyncpa [#allocation4], 1

</llo_original>
